<compile_context>
chip_gen: v6e
topology: v6e:2x2x1
jax: 0.10.0
libtpu: 0.0.40
codegen_flags: <defaults>
</compile_context>

<pallas_src>
import functools

import jax
import jax.numpy as jnp
from jax.experimental import pallas as pl
from jax.experimental.pallas import tpu as pltpu

LANE = 128        # lane width (feature-dim padding target)
SUBLANE_F32 = 8   # f32 packs 8 rows per vreg


def _round_up(n, m):
    return ((n + m - 1) // m) * m


def _cdiv(a, b):
    return (a + b - 1) // b


# --------------------------------------------------------------------------
# Kernel
# --------------------------------------------------------------------------
def _make_mlp_kernel(num_hidden):
    """Fused MLP kernel: `num_hidden` hidden layers + 1 output layer + sigmoid."""

    def kernel(*refs):
        # refs = [x_ref, w0, b0, w1, b1, ..., w_last, b_last, out_ref]
        x_ref = refs[0]
        n_params = 2 * (num_hidden + 1)
        param_refs = refs[1:1 + n_params]
        out_ref = refs[1 + n_params]

        # Input arrives in natural f32 layout; cast to bf16 for the MXU here.
        h = x_ref[...].astype(jnp.bfloat16)

        # Hidden layers: Linear -> LeakyReLU(0.2) -> Dropout(0.5) (eval: identity)
        for li in range(num_hidden):
            w = param_refs[2 * li][...]        # bf16 [K(, padded), N_p]
            b = param_refs[2 * li + 1][...]    # f32  [1, N_p]
            acc = jnp.dot(h, w, preferred_element_type=jnp.float32) + b
            acc = jnp.maximum(acc, 0.2 * acc)  # LeakyReLU(0.2), f32 epilogue
            # Dropout(0.5): identity in eval mode.
            h = acc.astype(jnp.bfloat16)

        # Final Linear: output lanes padded to 128 so the MXU is not fed N=1,
        # but only column 0 is real -> bias add / sigmoid / store on that
        # column only (no 128x wasted EUP work, 4 B/row writeback).
        w = param_refs[2 * num_hidden][...]
        b = param_refs[2 * num_hidden + 1][...]
        logits = jnp.dot(h, w, preferred_element_type=jnp.float32)
        z = logits[:, 0:1] + b[:, 0:1]
        out_ref[...] = jax.nn.sigmoid(z)

    return kernel


# --------------------------------------------------------------------------
# pallas_call wrapper
# --------------------------------------------------------------------------
@functools.partial(jax.jit, static_argnames=("num_hidden", "tile"))
def _run(x_in, flat_params, num_hidden, tile):
    Bp, K0 = x_in.shape
    grid_b = Bp // tile

    kernel = _make_mlp_kernel(num_hidden)

    # x / out tiled over batch; weights & biases resident (constant index map).
    x_spec = pl.BlockSpec((tile, K0), lambda i: (i, 0))
    param_specs = [pl.BlockSpec(p.shape, lambda i: (0, 0)) for p in flat_params]
    out_spec = pl.BlockSpec((tile, 1), lambda i: (i, 0))

    # Cost estimate for XLA's scheduler (matches what the kernel actually moves).
    flops = 0
    bytes_accessed = x_in.size * x_in.dtype.itemsize + Bp * 4  # input + (Bp,1) out
    for li in range(num_hidden + 1):
        w = flat_params[2 * li]
        b = flat_params[2 * li + 1]
        flops += 2 * Bp * w.shape[0] * w.shape[1]
        bytes_accessed += w.size * w.dtype.itemsize + b.size * b.dtype.itemsize
    cost = pl.CostEstimate(flops=flops,
                           transcendentals=Bp,      # one sigmoid exp per row
                           bytes_accessed=bytes_accessed)

    # VMEM footprint: double-buffered x / out blocks + (2x-allocated) params.
    vmem_need = 2 * (tile * K0 * x_in.dtype.itemsize + tile * 4)
    for p in flat_params:
        vmem_need += 2 * p.size * p.dtype.itemsize
    vmem_limit = None
    if vmem_need > 32 * 1024 * 1024:
        cap = 48 * 1024 * 1024              # safe under v7x's 64 MiB physical VMEM
        try:
            if pltpu.get_tpu_info().vmem_capacity_bytes >= 100 * 1024 * 1024:
                cap = 100 * 1024 * 1024     # 128 MiB parts (v5e / v6e)
        except Exception:
            pass
        vmem_limit = min(int(vmem_need * 1.25), cap)

    return pl.pallas_call(
        kernel,
        grid=(grid_b,),
        in_specs=[x_spec] + param_specs,
        out_specs=out_spec,
        out_shape=jax.ShapeDtypeStruct((Bp, 1), jnp.float32),
        compiler_params=pltpu.CompilerParams(
            dimension_semantics=("parallel",),   # batch axis: megacore-shardable
            vmem_limit_bytes=vmem_limit),
        cost_estimate=cost,
    )(x_in, *flat_params)


def _pad_params(params):
    """Zero-pad layers to lane-aligned shapes; cast weights to bf16 once.

    Layer 0 keeps its natural K (= input_dim) so x needs no feature padding.
    """
    padded = []
    for li, (w, b) in enumerate(params):
        k, n = w.shape
        kp = k if li == 0 else _round_up(k, LANE)
        n_p = _round_up(n, LANE)
        wp = jnp.zeros((kp, n_p), jnp.bfloat16).at[:k, :n].set(w.astype(jnp.bfloat16))
        bp = jnp.zeros((1, n_p), jnp.float32).at[:, :n].set(b.astype(jnp.float32))
        padded.append((wp, bp))
    return padded


def discriminator_forward(x, params, block_b=1024):
    """x: [B, input_dim] f32, params: list of (W [in,out], b [1,out]) f32."""
    B, input_dim = x.shape
    num_hidden = len(params) - 1

    flat = []
    for w, b in _pad_params(params):
        flat.extend([w, b])

    # Batch tiling: rows rounded to the f32 sublane (8).  As soon as B exceeds
    # one block there are >= 2 grid steps (v7x megacore) with < 8 rows waste.
    b8 = _round_up(max(B, 1), SUBLANE_F32)
    n_blocks = max(1, _cdiv(b8, block_b))
    tile = _round_up(_cdiv(b8, n_blocks), SUBLANE_F32)
    Bp = tile * n_blocks

    x_in = x if Bp == B else jnp.pad(x, ((0, Bp - B), (0, 0)))

    out = _run(x_in, tuple(flat), num_hidden, tile)   # (Bp, 1) f32
    return out if Bp == B else out[:B]


# --------------------------------------------------------------------------
# Params + references
# --------------------------------------------------------------------------
def init_discriminator_params(key, input_dim, hidden_layers_params):
    """Deterministic PyTorch-style init: U(-1/sqrt(fan_in), 1/sqrt(fan_in))."""
    dims = [input_dim] + list(hidden_layers_params) + [1]
    params = []
    for i in range(len(dims) - 1):
        fan_in, fan_out = dims[i], dims[i + 1]
        key, kw, kb = jax.random.split(key, 3)
        bound = 1.0 / jnp.sqrt(jnp.float32(fan_in))
        w = jax.random.uniform(kw, (fan_in, fan_out), jnp.float32, -bound, bound)
        b = jax.random.uniform(kb, (1, fan_out), jnp.float32, -bound, bound)
        params.append((w, b))
    return params


def discriminator_reference_bf16(x, params):
    """Plain-JAX reference mirroring the kernel's bf16 matmul operands."""
    h = x.astype(jnp.bfloat16)
    for w, b in params[:-1]:
        a = jnp.dot(h, w.astype(jnp.bfloat16), preferred_element_type=jnp.float32) + b
        a = jnp.where(a > 0, a, 0.2 * a)
        h = a.astype(jnp.bfloat16)
    w, b = params[-1]
    logits = jnp.dot(h, w.astype(jnp.bfloat16), preferred_element_type=jnp.float32) + b
    return jax.nn.sigmoid(logits)


def discriminator_reference_f32(x, params):
    """Full-precision reference (eval-mode dropout)."""
    h = x
    for w, b in params[:-1]:
        h = h @ w + b
        h = jnp.where(h > 0, h, 0.2 * h)
    w, b = params[-1]
    return jax.nn.sigmoid(h @ w + b)


# --------------------------------------------------------------------------
# Demo / correctness check
# --------------------------------------------------------------------------
if __name__ == "__main__":
    key = jax.random.PRNGKey(0)
    k_x, k_p = jax.random.split(key)

    B = 8
    input_dim = 32
    hidden_layers_params = [64, 32]

    x = jax.random.normal(k_x, (B, input_dim), jnp.float32)
    params = init_discriminator_params(k_p, input_dim, hidden_layers_params)

    out = discriminator_forward(x, params)
    out = jax.block_until_ready(out)

    ref_bf16 = discriminator_reference_bf16(x, params)
    ref_f32 = discriminator_reference_f32(x, params)

    assert out.shape == (B, 1), out.shape
    assert jnp.allclose(out, ref_bf16, atol=1e-4, rtol=1e-4), (out, ref_bf16)
    assert jnp.allclose(out, ref_f32, atol=3e-2, rtol=3e-2), (out, ref_f32)

    print("KERNEL_OK")
</pallas_src>

<mosaic_0001>
module attributes {stable_mosaic.version = 11 : i64} {
  func.func @kernel(%arg0: i32, %arg1: memref<8x32xf32, #tpu.memory_space<vmem>>, %arg2: memref<32x128xbf16, #tpu.memory_space<vmem>>, %arg3: memref<1x128xf32, #tpu.memory_space<vmem>>, %arg4: memref<128x128xbf16, #tpu.memory_space<vmem>>, %arg5: memref<1x128xf32, #tpu.memory_space<vmem>>, %arg6: memref<128x128xbf16, #tpu.memory_space<vmem>>, %arg7: memref<1x128xf32, #tpu.memory_space<vmem>>, %arg8: memref<8x1xf32, #tpu.memory_space<vmem>>) attributes {dimension_semantics = [#tpu.dimension_semantics<parallel>], iteration_bounds = array<i64: 1>, scalar_prefetch = 0 : i64, scratch_operands = 0 : i64, tpu.core_type = #tpu.core_type<tc>, window_params = [{transform_indices = @transform_0, window_bounds = array<i64: 8, 32>}, {pipeline_mode = #tpu.pipeline_mode<synchronous>, transform_indices = @transform_1, window_bounds = array<i64: 32, 128>}, {pipeline_mode = #tpu.pipeline_mode<synchronous>, transform_indices = @transform_2, window_bounds = array<i64: 1, 128>}, {pipeline_mode = #tpu.pipeline_mode<synchronous>, transform_indices = @transform_3, window_bounds = array<i64: 128, 128>}, {pipeline_mode = #tpu.pipeline_mode<synchronous>, transform_indices = @transform_4, window_bounds = array<i64: 1, 128>}, {pipeline_mode = #tpu.pipeline_mode<synchronous>, transform_indices = @transform_5, window_bounds = array<i64: 128, 128>}, {pipeline_mode = #tpu.pipeline_mode<synchronous>, transform_indices = @transform_6, window_bounds = array<i64: 1, 128>}, {transform_indices = @transform_7, window_bounds = array<i64: 8, 1>}]} {
    %c0 = arith.constant 0 : index
    %c0_0 = arith.constant 0 : index
    %0 = vector.load %arg1[%c0, %c0_0] : memref<8x32xf32, #tpu.memory_space<vmem>>, vector<8x32xf32>
    %1 = arith.truncf %0 : vector<8x32xf32> to vector<8x32xbf16>
    %c0_1 = arith.constant 0 : index
    %c0_2 = arith.constant 0 : index
    %2 = vector.load %arg2[%c0_1, %c0_2] : memref<32x128xbf16, #tpu.memory_space<vmem>>, vector<32x128xbf16>
    %c0_3 = arith.constant 0 : index
    %c0_4 = arith.constant 0 : index
    %3 = vector.load %arg3[%c0_3, %c0_4] : memref<1x128xf32, #tpu.memory_space<vmem>>, vector<1x128xf32>
    %cst = arith.constant dense<0.000000e+00> : vector<8x128xf32>
    %4 = tpu.matmul %1, %2, %cst {dimension_numbers = #tpu.dot_dimension_numbers<[1], [0], [0], [1], [0, 0, 1, 1], [], []>} : vector<8x32xbf16>, vector<32x128xbf16>, vector<8x128xf32> -> vector<8x128xf32>
    %5 = vector.broadcast %3 : vector<1x128xf32> to vector<8x128xf32>
    %6 = arith.addf %4, %5 : vector<8x128xf32>
    %cst_5 = arith.constant 2.000000e-01 : f32
    %7 = vector.broadcast %cst_5 : f32 to vector<8x128xf32>
    %8 = arith.mulf %7, %6 : vector<8x128xf32>
    %9 = arith.maximumf %6, %8 : vector<8x128xf32>
    %10 = arith.truncf %9 : vector<8x128xf32> to vector<8x128xbf16>
    %c0_6 = arith.constant 0 : index
    %c0_7 = arith.constant 0 : index
    %11 = vector.load %arg4[%c0_6, %c0_7] : memref<128x128xbf16, #tpu.memory_space<vmem>>, vector<128x128xbf16>
    %c0_8 = arith.constant 0 : index
    %c0_9 = arith.constant 0 : index
    %12 = vector.load %arg5[%c0_8, %c0_9] : memref<1x128xf32, #tpu.memory_space<vmem>>, vector<1x128xf32>
    %cst_10 = arith.constant dense<0.000000e+00> : vector<8x128xf32>
    %13 = tpu.matmul %10, %11, %cst_10 {dimension_numbers = #tpu.dot_dimension_numbers<[1], [0], [0], [1], [0, 0, 1, 1], [], []>} : vector<8x128xbf16>, vector<128x128xbf16>, vector<8x128xf32> -> vector<8x128xf32>
    %14 = vector.broadcast %12 : vector<1x128xf32> to vector<8x128xf32>
    %15 = arith.addf %13, %14 : vector<8x128xf32>
    %cst_11 = arith.constant 2.000000e-01 : f32
    %16 = vector.broadcast %cst_11 : f32 to vector<8x128xf32>
    %17 = arith.mulf %16, %15 : vector<8x128xf32>
    %18 = arith.maximumf %15, %17 : vector<8x128xf32>
    %19 = arith.truncf %18 : vector<8x128xf32> to vector<8x128xbf16>
    %c0_12 = arith.constant 0 : index
    %c0_13 = arith.constant 0 : index
    %20 = vector.load %arg6[%c0_12, %c0_13] : memref<128x128xbf16, #tpu.memory_space<vmem>>, vector<128x128xbf16>
    %c0_14 = arith.constant 0 : index
    %c0_15 = arith.constant 0 : index
    %21 = vector.load %arg7[%c0_14, %c0_15] : memref<1x128xf32, #tpu.memory_space<vmem>>, vector<1x128xf32>
    %cst_16 = arith.constant dense<0.000000e+00> : vector<8x128xf32>
    %22 = tpu.matmul %19, %20, %cst_16 {dimension_numbers = #tpu.dot_dimension_numbers<[1], [0], [0], [1], [0, 0, 1, 1], [], []>} : vector<8x128xbf16>, vector<128x128xbf16>, vector<8x128xf32> -> vector<8x128xf32>
    %23 = vector.extract_strided_slice %22 {offsets = [0, 0], sizes = [8, 1], strides = [1, 1]} : vector<8x128xf32> to vector<8x1xf32>
    %24 = vector.extract_strided_slice %21 {offsets = [0, 0], sizes = [1, 1], strides = [1, 1]} : vector<1x128xf32> to vector<1x1xf32>
    %25 = vector.broadcast %24 : vector<1x1xf32> to vector<8x1xf32>
    %26 = arith.addf %23, %25 : vector<8x1xf32>
    %27 = arith.negf %26 : vector<8x1xf32>
    %28 = math.exp %27 : vector<8x1xf32>
    %cst_17 = arith.constant 1.000000e+00 : f32
    %29 = vector.broadcast %cst_17 : f32 to vector<8x1xf32>
    %30 = arith.addf %29, %28 : vector<8x1xf32>
    %31 = arith.divf %29, %30 : vector<8x1xf32>
    %c0_18 = arith.constant 0 : index
    %c0_19 = arith.constant 0 : index
    %32 = vector.load %arg8[%c0_18, %c0_19] : memref<8x1xf32, #tpu.memory_space<vmem>>, vector<8x1xf32>
    tpu.vector_store %arg8[%c0_18, %c0_19], %31 {strides = array<i32>} : memref<8x1xf32, #tpu.memory_space<vmem>>, vector<8x1xf32>,
    return
  }
  func.func @transform_0(%arg0: i32) -> (i32, i32) {
    %c0_i32 = arith.constant 0 : i32
    %c0_i32_0 = arith.constant 0 : i32
    return %arg0, %c0_i32 : i32, i32
  }
  func.func @transform_1(%arg0: i32) -> (i32, i32) {
    %c0_i32 = arith.constant 0 : i32
    %c0_i32_0 = arith.constant 0 : i32
    %c0_i32_1 = arith.constant 0 : i32
    return %c0_i32, %c0_i32_0 : i32, i32
  }
  func.func @transform_2(%arg0: i32) -> (i32, i32) {
    %c0_i32 = arith.constant 0 : i32
    %c0_i32_0 = arith.constant 0 : i32
    %c0_i32_1 = arith.constant 0 : i32
    return %c0_i32, %c0_i32_0 : i32, i32
  }
  func.func @transform_3(%arg0: i32) -> (i32, i32) {
    %c0_i32 = arith.constant 0 : i32
    %c0_i32_0 = arith.constant 0 : i32
    %c0_i32_1 = arith.constant 0 : i32
    return %c0_i32, %c0_i32_0 : i32, i32
  }
  func.func @transform_4(%arg0: i32) -> (i32, i32) {
    %c0_i32 = arith.constant 0 : i32
    %c0_i32_0 = arith.constant 0 : i32
    %c0_i32_1 = arith.constant 0 : i32
    return %c0_i32, %c0_i32_0 : i32, i32
  }
  func.func @transform_5(%arg0: i32) -> (i32, i32) {
    %c0_i32 = arith.constant 0 : i32
    %c0_i32_0 = arith.constant 0 : i32
    %c0_i32_1 = arith.constant 0 : i32
    return %c0_i32, %c0_i32_0 : i32, i32
  }
  func.func @transform_6(%arg0: i32) -> (i32, i32) {
    %c0_i32 = arith.constant 0 : i32
    %c0_i32_0 = arith.constant 0 : i32
    %c0_i32_1 = arith.constant 0 : i32
    return %c0_i32, %c0_i32_0 : i32, i32
  }
  func.func @transform_7(%arg0: i32) -> (i32, i32) {
    %c0_i32 = arith.constant 0 : i32
    %c0_i32_0 = arith.constant 0 : i32
    return %arg0, %c0_i32 : i32, i32
  }
}

</mosaic_0001>

<llo_original>
// kernel: _run.1
$region0: #{_run.1}
  #allocation0 [shape = 'u32[]', space=smem, size = 0x4, offset = 0x4, fixed_abs, tag = 'smem constant byte address 0x4 - core index']
  #allocation1 [shape = 'u32[144,128]{1,0:T(1,128)}', space=vmem, size = 0x12000, scoped, tag = 'internal scratch']
  %s0 = inlined_call_operand.hbm [shape: f32[8,32], index: 0, kind: input, shape index: {}]
  %s1 = inlined_call_operand.hbm [shape: bf16[32,128], index: 1, kind: input, shape index: {}]
  %s2 = inlined_call_operand.vmem [shape: f32[1,128], index: 2, kind: input, shape index: {}]
  %s3 = inlined_call_operand.hbm [shape: bf16[128,128], index: 3, kind: input, shape index: {}]
  %s4 = inlined_call_operand.vmem [shape: f32[1,128], index: 4, kind: input, shape index: {}]
  %s5 = inlined_call_operand.hbm [shape: bf16[128,128], index: 5, kind: input, shape index: {}]
  %s6 = inlined_call_operand.vmem [shape: f32[1,128], index: 6, kind: input, shape index: {}]
  %s7 = inlined_call_operand.vmem [shape: f32[8,1], index: 7, kind: output, shape index: {}]
  %s8 = sld [smem:[#allocation0]]
  $region54: #{_run.1} parent=0
    _
  %s10 = ssub.s32 1, %s8
  %s11 = scalar_select 0, %s10, %s8
  $region1: #{_run.1} parent=0
    #allocation2 [shape = 'u8[4096]{0}', space=vmem, size = 0x1000, scoped, tag = 'input window, operand 0, single buffered']
    #allocation3 [shape = 's32[1]{0}', space=sflag, size = 0x4, scoped, tag = 'scoped memory for _run.1']
    #allocation4 [shape = 'u8[8192]{0}', space=vmem, size = 0x2000, scoped, tag = 'input window, operand 1, single buffered']
    #allocation5 [shape = 's32[1]{0}', space=sflag, size = 0x4, scoped, tag = 'scoped memory for _run.1']
    #allocation6 [shape = 'u8[32768]{0}', space=vmem, size = 0x8000, scoped, tag = 'input window, operand 3, single buffered']
    #allocation7 [shape = 'u8[32768]{0}', space=vmem, size = 0x8000, scoped, tag = 'input window, operand 5, single buffered']
    #allocation8 [shape = 's32[1]{0}', space=sflag, size = 0x4, scoped, tag = 'scoped memory for _run.1']
    %12 = vsyncpa [#allocation3], 0
    %13 = vsyncpa [#allocation5], 0
    %14 = vsyncpa [#allocation8], 0
    // Predicated region
    $region2: #{_run.1} parent=1 // pred_check
      _
    $region3: #{_run.1} parent=1 // pred_check_branch
      %16 = sbr.rel (0) target = $region5
    $region4: #{_run.1} parent=1 // pred_region
      %s18 = ssub.s32 128, 128
      %19 = vsyncadd [#allocation3], %s18
      %s21 = sshll.u32 [#allocation2], 4
      %s22 = int_to_ptr.vmem [resolvable:$true] %s21
      %24 = dma.hbm_to_vmem [thread:$0]  %s0, 128, %s22, [#allocation3]
    $region5: #{_run.1} parent=1 // pred_fallthru
      _
    // Predicated region
    $region6: #{_run.1} parent=1 // pred_check
      _
    $region7: #{_run.1} parent=1 // pred_check_branch
      %26 = sbr.rel (0) target = $region9
    $region8: #{_run.1} parent=1 // pred_region
      %s28 = ssub.s32 256, 256
      %29 = vsyncadd [#allocation5], %s28
      %s30 = sshll.u32 [#allocation4], 4
      %s31 = int_to_ptr.vmem [resolvable:$true] %s30
      %36 = dma.hbm_to_vmem [thread:$0]  %s1, 256, %s31, [#allocation5], 64, 64, 4
    $region9: #{_run.1} parent=1 // pred_fallthru
      _
    // Predicated region
    $region10: #{_run.1} parent=1 // pred_check
      _
    $region11: #{_run.1} parent=1 // pred_check_branch
      %38 = sbr.rel (0) target = $region13
    $region12: #{_run.1} parent=1 // pred_region
      _
    $region13: #{_run.1} parent=1 // pred_fallthru
      _
    // Predicated region
    $region14: #{_run.1} parent=1 // pred_check
      _
    $region15: #{_run.1} parent=1 // pred_check_branch
      %40 = sbr.rel (0) target = $region17
    $region16: #{_run.1} parent=1 // pred_region
      %s42 = ssub.s32 1024, 1024
      %43 = vsyncadd [#allocation5], %s42
      %s44 = sshll.u32 [#allocation6], 4
      %s45 = int_to_ptr.vmem [resolvable:$true] %s44
      %50 = dma.hbm_to_vmem [thread:$0]  %s3, 1024, %s45, [#allocation5], 64, 64, 4
    $region17: #{_run.1} parent=1 // pred_fallthru
      _
    // Predicated region
    $region18: #{_run.1} parent=1 // pred_check
      _
    $region19: #{_run.1} parent=1 // pred_check_branch
      %52 = sbr.rel (0) target = $region21
    $region20: #{_run.1} parent=1 // pred_region
      _
    $region21: #{_run.1} parent=1 // pred_fallthru
      _
    // Predicated region
    $region22: #{_run.1} parent=1 // pred_check
      _
    $region23: #{_run.1} parent=1 // pred_check_branch
      %54 = sbr.rel (0) target = $region25
    $region24: #{_run.1} parent=1 // pred_region
      %s56 = ssub.s32 1024, 1024
      %57 = vsyncadd [#allocation8], %s56
      %s58 = sshll.u32 [#allocation7], 4
      %s59 = int_to_ptr.vmem [resolvable:$true] %s58
      %64 = dma.hbm_to_vmem [thread:$0]  %s5, 1024, %s59, [#allocation8], 64, 64, 4
    $region25: #{_run.1} parent=1 // pred_fallthru
      _
    // Predicated region
    $region26: #{_run.1} parent=1 // pred_check
      _
    $region27: #{_run.1} parent=1 // pred_check_branch
      %66 = sbr.rel (0) target = $region29
    $region28: #{_run.1} parent=1 // pred_region
      _
    $region29: #{_run.1} parent=1 // pred_fallthru
      _
    // Predicated region
    $region30: #{_run.1} parent=1 // pred_check
      _
    $region31: #{_run.1} parent=1 // pred_check_branch
      %68 = sbr.rel (0) target = $region33
    $region32: #{_run.1} parent=1 // pred_region
      %69 = dma.done [#allocation3], 128
    $region33: #{_run.1} parent=1 // pred_fallthru
      _
    // Predicated region
    $region34: #{_run.1} parent=1 // pred_check
      _
    $region35: #{_run.1} parent=1 // pred_check_branch
      %71 = sbr.rel (0) target = $region37
    $region36: #{_run.1} parent=1 // pred_region
      %72 = dma.done [#allocation5], 256
    $region37: #{_run.1} parent=1 // pred_fallthru
      _
    // Predicated region
    $region38: #{_run.1} parent=1 // pred_check
      _
    $region39: #{_run.1} parent=1 // pred_check_branch
      %74 = sbr.rel (0) target = $region41
    $region40: #{_run.1} parent=1 // pred_region
      %75 = dma.done [#allocation5], 1024
    $region41: #{_run.1} parent=1 // pred_fallthru
      _
    // Predicated region
    $region42: #{_run.1} parent=1 // pred_check
      _
    $region43: #{_run.1} parent=1 // pred_check_branch
      %77 = sbr.rel (0) target = $region45
    $region44: #{_run.1} parent=1 // pred_region
      %78 = dma.done [#allocation8], 1024
    $region45: #{_run.1} parent=1 // pred_fallthru
      _
    %v80 = vld [vmem:[#allocation2] sm:$0xff]
    %v81 = vpack.c.bf16 %v80, %v80
    %v82 = vld [vmem:[#allocation4] sm:$0xf]
    %v83 = vld [vmem:[#allocation4 + $0x4] sm:$0xf]
    %v84 = vld [vmem:[#allocation4 + $0x8] sm:$0xf]
    %v85 = vld [vmem:[#allocation4 + $0xc] sm:$0xf]
    %v86 = vld [vmem:[%s2] sm:$0x1]
    %v88 = vlaneseq
    %v89 = vshrl.u32 %v88, 7
    %v90 = vsub.s32 0, %v89
    %v91 = vrot.slane %v86, %v90
    %v97 = vunpack.c.l.b16 %v82
    %v98 = vunpack.c.l.b16 %v83
    %v99 = vunpack.c.l.b16 %v84
    %v100 = vunpack.c.l.b16 %v85
    %v101 = vpack.c.b16 %v98, %v97
    %v102 = vpack.c.b16 %v100, %v99
    %vm105 = vcmask 261120
    %v107 = vsel %vm105, %v81, 0
    %109 = vmatprep.subr.bf16.mxu0 0
    %110 = vmatpush1.bf16.msra.mxu0 0
    %111 = vmatprep.subr.bf16.mxu0 0
    %112 = vmatpush1.bf16.msra.mxu0 0
    %113 = vmatprep.subr.bf16.mxu0 0
    %114 = vmatpush1.bf16.msra.mxu0 0
    %115 = vmatprep.subr.bf16.mxu0 0
    %116 = vmatpush1.bf16.msra.mxu0 0
    %117 = vmatprep.subr.bf16.mxu0 0
    %118 = vmatpush1.bf16.msra.mxu0 0
    %119 = vmatprep.subr.bf16.mxu0 0
    %120 = vmatpush1.bf16.msra.mxu0 0
    %121 = vmatprep.subr.bf16.mxu0 0
    %122 = vmatpush1.bf16.msra.mxu0 %v102
    %123 = vmatprep.subr.bf16.mxu0 0
    %124 = vmatpush1.bf16.msra.mxu0 %v101
    %125 = vmatprep.subr.bf16.mxu0 0
    %126 = vmatpush2.bf16.msra.mxu0 0
    %127 = vmatprep.subr.bf16.mxu0 0
    %128 = vmatpush2.bf16.msra.mxu0 0
    %129 = vmatprep.subr.bf16.mxu0 0
    %130 = vmatpush2.bf16.msra.mxu0 0
    %131 = vmatprep.subr.bf16.mxu0 0
    %132 = vmatpush2.bf16.msra.mxu0 0
    %133 = vmatprep.subr.bf16.mxu0 0
    %134 = vmatpush2.bf16.msra.mxu0 0
    %135 = vmatprep.subr.bf16.mxu0 0
    %136 = vmatpush2.bf16.msra.mxu0 0
    %137 = vmatprep.subr.bf16.mxu0 0
    %138 = vmatpush2.bf16.msra.mxu0 0
    %139 = vmatprep.subr.bf16.mxu0 0
    %140 = vmatpush2.bf16.msra.mxu0 0
    %141 = vmatprep.mubr.bf16.mxu0 0
    %142 = vmatmul.mubr.bf16.gmra.mxu0 %v107
    %v143 = vpop.f32.mrf.mxu0
    %v144 = vadd.f32 %v91, %v143
    %v145 = vpop.f32.mrf.mxu0
    %v146 = vpop.f32.mrf.mxu0
    %v147 = vpop.f32.mrf.mxu0
    %148 = vdwg.mxu0
    %v149 = vmul.f32 %v144, 0.2
    %v150 = vmax.f32 %v144, %v149
    %v151 = vpack.c.bf16 %v150, %v150
    %v152 = vld [vmem:[#allocation6] sm:$0xf]
    %v153 = vld [vmem:[#allocation6 + $0x4] sm:$0xf]
    %v154 = vld [vmem:[#allocation6 + $0x8] sm:$0xf]
    %v155 = vld [vmem:[#allocation6 + $0xc] sm:$0xf]
    %v156 = vld [vmem:[#allocation6 + $0x10] sm:$0xf]
    %v157 = vld [vmem:[#allocation6 + $0x14] sm:$0xf]
    %v158 = vld [vmem:[#allocation6 + $0x18] sm:$0xf]
    %v159 = vld [vmem:[#allocation6 + $0x1c] sm:$0xf]
    %v160 = vld [vmem:[#allocation6 + $0x20] sm:$0xf]
    %v161 = vld [vmem:[#allocation6 + $0x24] sm:$0xf]
    %v162 = vld [vmem:[#allocation6 + $0x28] sm:$0xf]
    %v163 = vld [vmem:[#allocation6 + $0x2c] sm:$0xf]
    %v164 = vld [vmem:[#allocation6 + $0x30] sm:$0xf]
    %v165 = vld [vmem:[#allocation6 + $0x34] sm:$0xf]
    %v166 = vld [vmem:[#allocation6 + $0x38] sm:$0xf]
    %v167 = vld [vmem:[#allocation6 + $0x3c] sm:$0xf]
    %v168 = vld [vmem:[%s4] sm:$0x1]
    %v170 = vlaneseq
    %v171 = vshrl.u32 %v170, 7
    %v172 = vsub.s32 0, %v171
    %v173 = vrot.slane %v168, %v172
    %v191 = vunpack.c.l.b16 %v152
    %v192 = vunpack.c.l.b16 %v153
    %v193 = vunpack.c.l.b16 %v154
    %v194 = vunpack.c.l.b16 %v155
    %v195 = vunpack.c.l.b16 %v156
    %v196 = vunpack.c.l.b16 %v157
    %v197 = vunpack.c.l.b16 %v158
    %v198 = vunpack.c.l.b16 %v159
    %v199 = vunpack.c.l.b16 %v160
    %v200 = vunpack.c.l.b16 %v161
    %v201 = vunpack.c.l.b16 %v162
    %v202 = vunpack.c.l.b16 %v163
    %v203 = vunpack.c.l.b16 %v164
    %v204 = vunpack.c.l.b16 %v165
    %v205 = vunpack.c.l.b16 %v166
    %v206 = vunpack.c.l.b16 %v167
    %v207 = vpack.c.b16 %v192, %v191
    %v208 = vpack.c.b16 %v194, %v193
    %v209 = vpack.c.b16 %v196, %v195
    %v210 = vpack.c.b16 %v198, %v197
    %v211 = vpack.c.b16 %v200, %v199
    %v212 = vpack.c.b16 %v202, %v201
    %v213 = vpack.c.b16 %v204, %v203
    %v214 = vpack.c.b16 %v206, %v205
    %223 = vmatprep.subr.bf16.mxu0 0
    %224 = vmatpush1.bf16.msra.mxu0 %v214
    %225 = vmatprep.subr.bf16.mxu0 0
    %226 = vmatpush1.bf16.msra.mxu0 %v213
    %227 = vmatprep.subr.bf16.mxu0 0
    %228 = vmatpush1.bf16.msra.mxu0 %v212
    %229 = vmatprep.subr.bf16.mxu0 0
    %230 = vmatpush1.bf16.msra.mxu0 %v211
    %231 = vmatprep.subr.bf16.mxu0 0
    %232 = vmatpush1.bf16.msra.mxu0 %v210
    %233 = vmatprep.subr.bf16.mxu0 0
    %234 = vmatpush1.bf16.msra.mxu0 %v209
    %235 = vmatprep.subr.bf16.mxu0 0
    %236 = vmatpush1.bf16.msra.mxu0 %v208
    %237 = vmatprep.subr.bf16.mxu0 0
    %238 = vmatpush1.bf16.msra.mxu0 %v207
    %239 = vmatprep.subr.bf16.mxu0 0
    %240 = vmatpush2.bf16.msra.mxu0 0
    %241 = vmatprep.subr.bf16.mxu0 0
    %242 = vmatpush2.bf16.msra.mxu0 0
    %243 = vmatprep.subr.bf16.mxu0 0
    %244 = vmatpush2.bf16.msra.mxu0 0
    %245 = vmatprep.subr.bf16.mxu0 0
    %246 = vmatpush2.bf16.msra.mxu0 0
    %247 = vmatprep.subr.bf16.mxu0 0
    %248 = vmatpush2.bf16.msra.mxu0 0
    %249 = vmatprep.subr.bf16.mxu0 0
    %250 = vmatpush2.bf16.msra.mxu0 0
    %251 = vmatprep.subr.bf16.mxu0 0
    %252 = vmatpush2.bf16.msra.mxu0 0
    %253 = vmatprep.subr.bf16.mxu0 0
    %254 = vmatpush2.bf16.msra.mxu0 0
    %255 = vmatprep.mubr.bf16.mxu0 0
    %256 = vmatmul.mubr.bf16.gmra.mxu0 %v151
    %v257 = vpop.f32.mrf.mxu0
    %v258 = vadd.f32 %v173, %v257
    %v259 = vpop.f32.mrf.mxu0
    %v260 = vpop.f32.mrf.mxu0
    %v261 = vpop.f32.mrf.mxu0
    %262 = vdwg.mxu0
    %v263 = vmul.f32 %v258, 0.2
    %v264 = vmax.f32 %v258, %v263
    %v265 = vpack.c.bf16 %v264, %v264
    %v266 = vld [vmem:[#allocation7] sm:$0xf]
    %v267 = vld [vmem:[#allocation7 + $0x4] sm:$0xf]
    %v268 = vld [vmem:[#allocation7 + $0x8] sm:$0xf]
    %v269 = vld [vmem:[#allocation7 + $0xc] sm:$0xf]
    %v270 = vld [vmem:[#allocation7 + $0x10] sm:$0xf]
    %v271 = vld [vmem:[#allocation7 + $0x14] sm:$0xf]
    %v272 = vld [vmem:[#allocation7 + $0x18] sm:$0xf]
    %v273 = vld [vmem:[#allocation7 + $0x1c] sm:$0xf]
    %v274 = vld [vmem:[#allocation7 + $0x20] sm:$0xf]
    %v275 = vld [vmem:[#allocation7 + $0x24] sm:$0xf]
    %v276 = vld [vmem:[#allocation7 + $0x28] sm:$0xf]
    %v277 = vld [vmem:[#allocation7 + $0x2c] sm:$0xf]
    %v278 = vld [vmem:[#allocation7 + $0x30] sm:$0xf]
    %v279 = vld [vmem:[#allocation7 + $0x34] sm:$0xf]
    %v280 = vld [vmem:[#allocation7 + $0x38] sm:$0xf]
    %v281 = vld [vmem:[#allocation7 + $0x3c] sm:$0xf]
    %v282 = vld [vmem:[%s6] sm:$0x1]
    %v299 = vunpack.c.l.b16 %v266
    %v300 = vunpack.c.l.b16 %v267
    %v301 = vunpack.c.l.b16 %v268
    %v302 = vunpack.c.l.b16 %v269
    %v303 = vunpack.c.l.b16 %v270
    %v304 = vunpack.c.l.b16 %v271
    %v305 = vunpack.c.l.b16 %v272
    %v306 = vunpack.c.l.b16 %v273
    %v307 = vunpack.c.l.b16 %v274
    %v308 = vunpack.c.l.b16 %v275
    %v309 = vunpack.c.l.b16 %v276
    %v310 = vunpack.c.l.b16 %v277
    %v311 = vunpack.c.l.b16 %v278
    %v312 = vunpack.c.l.b16 %v279
    %v313 = vunpack.c.l.b16 %v280
    %v314 = vunpack.c.l.b16 %v281
    %v315 = vpack.c.b16 %v300, %v299
    %v316 = vpack.c.b16 %v302, %v301
    %v317 = vpack.c.b16 %v304, %v303
    %v318 = vpack.c.b16 %v306, %v305
    %v319 = vpack.c.b16 %v308, %v307
    %v320 = vpack.c.b16 %v310, %v309
    %v321 = vpack.c.b16 %v312, %v311
    %v322 = vpack.c.b16 %v314, %v313
    %331 = vmatprep.subr.bf16.mxu0 0
    %332 = vmatpush1.bf16.msra.mxu0 %v322
    %333 = vmatprep.subr.bf16.mxu0 0
    %334 = vmatpush1.bf16.msra.mxu0 %v321
    %335 = vmatprep.subr.bf16.mxu0 0
    %336 = vmatpush1.bf16.msra.mxu0 %v320
    %337 = vmatprep.subr.bf16.mxu0 0
    %338 = vmatpush1.bf16.msra.mxu0 %v319
    %339 = vmatprep.subr.bf16.mxu0 0
    %340 = vmatpush1.bf16.msra.mxu0 %v318
    %341 = vmatprep.subr.bf16.mxu0 0
    %342 = vmatpush1.bf16.msra.mxu0 %v317
    %343 = vmatprep.subr.bf16.mxu0 0
    %344 = vmatpush1.bf16.msra.mxu0 %v316
    %345 = vmatprep.subr.bf16.mxu0 0
    %346 = vmatpush1.bf16.msra.mxu0 %v315
    %347 = vmatprep.subr.bf16.mxu0 0
    %348 = vmatpush2.bf16.msra.mxu0 0
    %349 = vmatprep.subr.bf16.mxu0 0
    %350 = vmatpush2.bf16.msra.mxu0 0
    %351 = vmatprep.subr.bf16.mxu0 0
    %352 = vmatpush2.bf16.msra.mxu0 0
    %353 = vmatprep.subr.bf16.mxu0 0
    %354 = vmatpush2.bf16.msra.mxu0 0
    %355 = vmatprep.subr.bf16.mxu0 0
    %356 = vmatpush2.bf16.msra.mxu0 0
    %357 = vmatprep.subr.bf16.mxu0 0
    %358 = vmatpush2.bf16.msra.mxu0 0
    %359 = vmatprep.subr.bf16.mxu0 0
    %360 = vmatpush2.bf16.msra.mxu0 0
    %361 = vmatprep.subr.bf16.mxu0 0
    %362 = vmatpush2.bf16.msra.mxu0 0
    %363 = vmatprep.mubr.bf16.mxu0 0
    %364 = vmatmul.mubr.bf16.gmra.mxu0 %v265
    %v365 = vpop.f32.mrf.mxu0
    %v366 = vadd.f32 0.0, %v365
    %v367 = vpop.f32.mrf.mxu0
    %v368 = vpop.f32.mrf.mxu0
    %v369 = vpop.f32.mrf.mxu0
    %370 = vdwg.mxu0
    %v372 = vlaneseq
    %v373 = vshrl.u32 %v372, 7
    %v374 = vsub.s32 0, %v373
    %v375 = vrot.slane %v282, %v374
    %v377 = vadd.f32 %v366, %v375
    %v378 = vxor.u32 %v377, 2147483648
    %v379 = vmul.f32 %v378, 1.442695
    %v380 = vpow.pop %v379
    %v381 = vadd.f32 %v380, 1.0
    %v382 = vrcp.pop %v381
    %v383 = vmul.f32 1.0, %v382
    %vm384 = vcmask 7168
    %385 = vst.msk [vmem:[%s7] sm:$0xff] %vm384, %v383
    // Predicated region
    $region46: #{_run.1} parent=1 // pred_check
      _
    $region47: #{_run.1} parent=1 // pred_check_branch
      %387 = sbr.rel (0) target = $region49
    $region48: #{_run.1} parent=1 // pred_region
      _
    $region49: #{_run.1} parent=1 // pred_fallthru
      _
    // Predicated region
    $region50: #{_run.1} parent=1 // pred_check
      _
    $region51: #{_run.1} parent=1 // pred_check_branch
      %389 = sbr.rel (0) target = $region53
    $region52: #{_run.1} parent=1 // pred_region
      _
    $region53: #{_run.1} parent=1 // pred_fallthru
      _
    %390 = vsyncpa [#allocation3], 1
    %391 = vsyncpa [#allocation5], 1
    %392 = vsyncpa [#allocation8], 1

</llo_original>
